<compile_context>
chip_gen: v5e
topology: v5e:2x2
jax: 0.10.0
libtpu: 0.0.40
codegen_flags: <defaults>
</compile_context>

<pallas_src>
import functools
import numpy as np
import jax
import jax.numpy as jnp
from jax.experimental import pallas as pl
from jax.experimental.pallas import tpu as pltpu


def _compute_vmem_limit():
    """Generation-aware scoped-VMEM limit: ~3/4 of physical, capped at 96 MiB.

    v5e/v6e (128 MiB physical) -> 96 MiB, v7x (64 MiB per TC) -> 48 MiB.
    Falls back to a v7x-safe 48 MiB if the query is unavailable.
    """
    try:
        cap = int(pltpu.get_tpu_info().vmem_capacity_bytes)
        if cap <= 0:
            raise ValueError
    except Exception:
        cap = 64 * 1024 * 1024
    return min((cap * 3) // 4, 96 * 1024 * 1024)


_VMEM_LIMIT = _compute_vmem_limit()


def _round_up(v, m):
    return ((v + m - 1) // m) * m


def _m_tiles(m):
    """Pick a sublane/MXU-friendly row tile and the padded row count.

    Instead of shrinking the tile to whatever divides M (which collapsed to
    8/64 for ViT token counts like B*197), pad M up to a multiple of the tile.
    """
    if m >= 1024:
        tm = 256
    elif m >= 256:
        tm = 128
    else:
        tm = min(_round_up(m, 8), 256)
    return tm, _round_up(m, tm)


def _pick_tile(dim, candidates):
    for c in candidates:
        if dim % c == 0:
            return c
    return dim


def _pad_rows(x2, mp):
    m = x2.shape[0]
    if mp == m:
        return x2
    return jnp.pad(x2, ((0, mp - m), (0, 0)))


def _gelu_exact(x):
    # erf-based (exact) GELU as in torch nn.GELU().  lax.erf has no guaranteed
    # Mosaic lowering, so use the Abramowitz & Stegun 7.1.26 rational
    # approximation of erf (|err| < 1.5e-7, i.e. f32 round-off level).
    a1, a2, a3, a4, a5 = (0.254829592, -0.284496736, 1.421413741,
                          -1.453152027, 1.061405429)
    p = 0.3275911
    z = x * 0.7071067811865476          # x / sqrt(2)
    sgn = jnp.where(z >= 0.0, 1.0, -1.0)
    az = jnp.abs(z)
    t = 1.0 / (1.0 + p * az)
    poly = ((((a5 * t + a4) * t + a3) * t + a2) * t + a1) * t
    erf = sgn * (1.0 - poly * jnp.exp(-az * az))
    return 0.5 * x * (1.0 + erf)


# ----------------------------------------------------------------------------
# Fused tiled linear: [LayerNorm ->] x @ W + b [-> GELU] [-> + residual]
# ----------------------------------------------------------------------------

def _fused_linear_kernel(*refs, has_ln, act, has_res, single_k):
    it = iter(refs)
    x_ref = next(it)
    w_ref = next(it)                    # bf16 weights (pre-cast in params)
    b_ref = next(it)
    g_ref = next(it) if has_ln else None
    gb_ref = next(it) if has_ln else None
    r_ref = next(it) if has_res else None
    o_ref = next(it)
    acc_ref = None if single_k else next(it)
    xn_ref = next(it) if has_ln else None

    k = pl.program_id(2)
    nk = pl.num_programs(2)

    if has_ln:
        # has_ln forces tk == K (single k step) and the x block index (i, k)
        # does not depend on j: LayerNorm + bf16 cast only once per row block
        # (j == 0), cache in VMEM and reuse for every N tile.  LN stats in f32
        # (v5e has no bf16 VPU path).
        @pl.when(pl.program_id(1) == 0)
        def _():
            xf = x_ref[...].astype(jnp.float32)
            mu = jnp.mean(xf, axis=-1, keepdims=True)
            var = jnp.mean(jnp.square(xf - mu), axis=-1, keepdims=True)
            xn = (xf - mu) * jax.lax.rsqrt(var + 1e-5) * g_ref[...] + gb_ref[...]
            xn_ref[...] = xn.astype(jnp.bfloat16)
        xb = xn_ref[...]
    else:
        xb = x_ref[...]
        if xb.dtype != jnp.bfloat16:
            xb = xb.astype(jnp.bfloat16)

    part = jnp.dot(xb, w_ref[...], preferred_element_type=jnp.float32)

    def _epilogue(acc):
        out = acc + b_ref[...]
        if act == "gelu":
            out = _gelu_exact(out)
        if has_res:
            out = out + r_ref[...].astype(jnp.float32)
        o_ref[...] = out.astype(o_ref.dtype)

    if single_k:
        _epilogue(part)                 # no f32 accumulator scratch needed
    else:
        @pl.when(k == 0)
        def _():
            acc_ref[...] = jnp.zeros_like(acc_ref)
        acc_ref[...] += part

        @pl.when(k == nk - 1)
        def _():
            _epilogue(acc_ref[...])


def fused_linear(x, w, b, *, ln_g=None, ln_b=None, act=None, residual=None,
                 out_dtype=jnp.bfloat16):
    """y = [residual +] act( LN?(x) @ W + b ), arbitrary leading dims."""
    lead = x.shape[:-1]
    K = x.shape[-1]
    N = w.shape[1]
    x2 = x.reshape(-1, K)
    M = x2.shape[0]
    has_ln = ln_g is not None
    has_res = residual is not None

    if w.dtype != jnp.bfloat16:
        w = w.astype(jnp.bfloat16)

    tm, Mp = _m_tiles(M)
    tn = _pick_tile(N, (512, 256, 128))
    tk = K if has_ln else _pick_tile(K, (512, 256, 128))
    grid = (Mp // tm, N // tn, K // tk)
    single_k = grid[2] == 1

    x2 = _pad_rows(x2, Mp)              # pad rows; garbage rows sliced off below

    in_specs = [pl.BlockSpec((tm, tk), lambda i, j, k: (i, k)),
                pl.BlockSpec((tk, tn), lambda i, j, k: (k, j)),
                pl.BlockSpec((1, tn), lambda i, j, k: (0, j))]
    args = [x2, w, b.reshape(1, N).astype(jnp.float32)]
    if has_ln:
        in_specs += [pl.BlockSpec((1, tk), lambda i, j, k: (0, k)),
                     pl.BlockSpec((1, tk), lambda i, j, k: (0, k))]
        args += [ln_g.reshape(1, K).astype(jnp.float32),
                 ln_b.reshape(1, K).astype(jnp.float32)]
    if has_res:
        in_specs += [pl.BlockSpec((tm, tn), lambda i, j, k: (i, j))]
        args += [_pad_rows(residual.reshape(M, N), Mp)]

    scratch = []
    if not single_k:
        scratch.append(pltpu.VMEM((tm, tn), jnp.float32))
    if has_ln:
        scratch.append(pltpu.VMEM((tm, tk), jnp.bfloat16))

    # When caching the normalized row block across the N-tile axis, that axis
    # must stay on a single core -> "arbitrary"; the row axis carries the
    # cross-core parallelism (>= 2 blocks after padding feeds both v7x TCs).
    dims = (("parallel", "arbitrary", "arbitrary") if has_ln
            else ("parallel", "parallel", "arbitrary"))

    kern = functools.partial(_fused_linear_kernel, has_ln=has_ln, act=act,
                             has_res=has_res, single_k=single_k)
    out = pl.pallas_call(
        kern,
        out_shape=jax.ShapeDtypeStruct((Mp, N), out_dtype),
        grid=grid,
        in_specs=in_specs,
        out_specs=pl.BlockSpec((tm, tn), lambda i, j, k: (i, j)),
        scratch_shapes=scratch,
        compiler_params=pltpu.CompilerParams(
            dimension_semantics=dims,
            vmem_limit_bytes=_VMEM_LIMIT),
    )(*args)
    return out[:M].reshape(*lead, N)


# ----------------------------------------------------------------------------
# Row-tiled LayerNorm (only for the target-encoder output norm)
# ----------------------------------------------------------------------------

def _layernorm_kernel(x_ref, g_ref, b_ref, o_ref):
    x = x_ref[...].astype(jnp.float32)
    mu = jnp.mean(x, axis=-1, keepdims=True)
    var = jnp.mean(jnp.square(x - mu), axis=-1, keepdims=True)
    o_ref[...] = ((x - mu) * jax.lax.rsqrt(var + 1e-5) * g_ref[...]
                  + b_ref[...]).astype(o_ref.dtype)


def layernorm(x, g, b, out_dtype=jnp.float32):
    lead = x.shape[:-1]
    D = x.shape[-1]
    x2 = x.reshape(-1, D)
    M = x2.shape[0]
    tm, Mp = _m_tiles(M)
    x2 = _pad_rows(x2, Mp)
    out = pl.pallas_call(
        _layernorm_kernel,
        out_shape=jax.ShapeDtypeStruct((Mp, D), out_dtype),
        grid=(Mp // tm,),
        in_specs=[pl.BlockSpec((tm, D), lambda i: (i, 0)),
                  pl.BlockSpec((1, D), lambda i: (0, 0)),
                  pl.BlockSpec((1, D), lambda i: (0, 0))],
        out_specs=pl.BlockSpec((tm, D), lambda i: (i, 0)),
        compiler_params=pltpu.CompilerParams(
            dimension_semantics=("parallel",),
            vmem_limit_bytes=_VMEM_LIMIT),
    )(x2, g.reshape(1, D).astype(jnp.float32), b.reshape(1, D).astype(jnp.float32))
    return out[:M].reshape(*lead, D)


# ----------------------------------------------------------------------------
# Attention: one batch element per grid step, heads split inside the kernel
# ----------------------------------------------------------------------------

def _attention_kernel(qkv_ref, o_ref, *, num_heads, head_dim, scale):
    # TODO(synk): a head-major / 128-lane-padded QKV layout (or batching heads
    # per dot) would raise MXU lane occupancy on the 256-wide v6e/v7x MXU;
    # kept token-major here to avoid extra XLA-level relayouts of QKV.
    qkv = qkv_ref[0]                                 # (T, 3*D) bf16
    D = num_heads * head_dim
    for h in range(num_heads):                       # static unroll
        lo = h * head_dim
        # pre-scale q (T*hd multiplies) instead of the (T,T) score matrix
        q = (qkv[:, lo:lo + head_dim].astype(jnp.float32) * scale
             ).astype(jnp.bfloat16)
        k = qkv[:, D + lo:D + lo + head_dim]
        v = qkv[:, 2 * D + lo:2 * D + lo + head_dim]
        # NT matmul: contract last dims of q and k (no materialized k.T).
        s = jax.lax.dot_general(q, k, (((1,), (1,)), ((), ())),
                                preferred_element_type=jnp.float32)
        s = s - jnp.max(s, axis=-1, keepdims=True)
        e = jnp.exp(s)
        p = e * pl.reciprocal(jnp.sum(e, axis=-1, keepdims=True), approx=True)
        o_h = jnp.dot(p.astype(jnp.bfloat16), v, preferred_element_type=jnp.float32)
        # per-head store: avoids holding all heads live (vreg spills) and the
        # lane-relayout of a final concatenate.
        o_ref[0, :, lo:lo + head_dim] = o_h.astype(o_ref.dtype)


def attention(qkv, num_heads, head_dim):
    B, T, threeD = qkv.shape
    D = num_heads * head_dim
    if qkv.dtype != jnp.bfloat16:
        qkv = qkv.astype(jnp.bfloat16)
    kern = functools.partial(_attention_kernel, num_heads=num_heads,
                             head_dim=head_dim, scale=head_dim ** -0.5)
    return pl.pallas_call(
        kern,
        out_shape=jax.ShapeDtypeStruct((B, T, D), jnp.bfloat16),
        grid=(B,),
        in_specs=[pl.BlockSpec((1, T, threeD), lambda i: (i, 0, 0))],
        out_specs=pl.BlockSpec((1, T, D), lambda i: (i, 0, 0)),
        compiler_params=pltpu.CompilerParams(
            dimension_semantics=("parallel",),
            vmem_limit_bytes=_VMEM_LIMIT),
    )(qkv)


# ----------------------------------------------------------------------------
# Masked-cosine IJEPA loss, tiled over batch with a persistent accumulator
# ----------------------------------------------------------------------------

def _ijepa_loss_kernel(m_ref, t_ref, p_ref, o_ref, acc_ref):
    j = pl.program_id(0)
    nb = pl.num_programs(0)

    @pl.when(j == 0)
    def _():
        acc_ref[...] = jnp.zeros_like(acc_ref)

    t = t_ref[0]                                  # (P, D) f32
    pr = p_ref[0]                                 # (P, D) f32
    m = m_ref[...]                                # (B, P) f32
    # F.normalize(dim=-1): x / max(||x||_2, 1e-12)
    t_n = t / jnp.maximum(jnp.sqrt(jnp.sum(t * t, axis=-1, keepdims=True)), 1e-12)
    p_n = pr / jnp.maximum(jnp.sqrt(jnp.sum(pr * pr, axis=-1, keepdims=True)), 1e-12)
    sim = jnp.sum(t_n * p_n, axis=-1, keepdims=True)             # (P, 1)
    # cross-batch term: embedding row j against all mask rows i
    num = jnp.dot(m, sim, preferred_element_type=jnp.float32)    # (B, 1)
    den = jnp.sum(m, axis=-1, keepdims=True) + 1e-6               # (B, 1)
    acc_ref[...] += jnp.sum(-num / den).reshape(1, 1)

    @pl.when(j == nb - 1)
    def _():
        o_ref[...] = acc_ref[...] / (nb * nb)


def ijepa_loss(target_emb, pred_emb, masks2d):
    B, P, D = target_emb.shape
    out = pl.pallas_call(
        _ijepa_loss_kernel,
        out_shape=jax.ShapeDtypeStruct((1, 1), jnp.float32),
        grid=(B,),
        in_specs=[pl.BlockSpec((B, P), lambda j: (0, 0)),
                  pl.BlockSpec((1, P, D), lambda j: (j, 0, 0)),
                  pl.BlockSpec((1, P, D), lambda j: (j, 0, 0))],
        out_specs=pl.BlockSpec((1, 1), lambda j: (0, 0)),
        scratch_shapes=[pltpu.VMEM((1, 1), jnp.float32)],
        compiler_params=pltpu.CompilerParams(
            dimension_semantics=("arbitrary",),      # scalar accumulator: no core split
            vmem_limit_bytes=_VMEM_LIMIT),
    )(masks2d, target_emb, pred_emb)
    return out[0, 0]


# ----------------------------------------------------------------------------
# Positional embeddings (deterministic, numpy, init-time only)
# ----------------------------------------------------------------------------

def get_1d_sincos_pos_embed_from_grid(embed_dim, pos):
    omega = np.arange(embed_dim // 2, dtype=np.float64) / (embed_dim / 2.0)
    omega = 1.0 / (10000 ** omega)
    pos = pos.reshape(-1)
    out = np.einsum("m,d->md", pos, omega)
    return np.concatenate([np.sin(out), np.cos(out)], axis=1)


def get_2d_sincos_pos_embed(embed_dim, grid_size, cls_token=False):
    grid_h = np.arange(grid_size, dtype=np.float64)
    grid_w = np.arange(grid_size, dtype=np.float64)
    grid = np.meshgrid(grid_w, grid_h)
    grid = np.stack(grid, axis=0).reshape([2, 1, grid_size, grid_size])
    emb_h = get_1d_sincos_pos_embed_from_grid(embed_dim // 2, grid[0])
    emb_w = get_1d_sincos_pos_embed_from_grid(embed_dim // 2, grid[1])
    pos = np.concatenate([emb_h, emb_w], axis=1)
    if cls_token:
        pos = np.concatenate([np.zeros([1, embed_dim]), pos], axis=0)
    return pos


# ----------------------------------------------------------------------------
# Parameters (deterministic synthetic init — shapes match the PyTorch module;
# weight matrices pre-cast to bf16, biases / LN params stay f32)
# ----------------------------------------------------------------------------

def init_ijepa_params(key, img_size, patch_size, in_chans, embed_dim, depth,
                      num_heads, predictor_embed_dim, predictor_depth,
                      predictor_num_heads, mlp_ratio):
    grid_size = img_size // patch_size
    keys = iter(jax.random.split(key, 64))

    def lin(din, dout):
        w = (0.02 * jax.random.normal(next(keys), (din, dout), jnp.float32)
             ).astype(jnp.bfloat16)
        return w, jnp.zeros((dout,), jnp.float32)

    def make_blocks(n, dim, heads):
        blks = []
        hidden = int(dim * mlp_ratio)
        for _ in range(n):
            qkv_w, qkv_b = lin(dim, 3 * dim)
            proj_w, proj_b = lin(dim, dim)
            fc1_w, fc1_b = lin(dim, hidden)
            fc2_w, fc2_b = lin(hidden, dim)
            blks.append(dict(
                ln1_g=jnp.ones((dim,), jnp.float32), ln1_b=jnp.zeros((dim,), jnp.float32),
                qkv_w=qkv_w, qkv_b=qkv_b, proj_w=proj_w, proj_b=proj_b,
                ln2_g=jnp.ones((dim,), jnp.float32), ln2_b=jnp.zeros((dim,), jnp.float32),
                fc1_w=fc1_w, fc1_b=fc1_b, fc2_w=fc2_w, fc2_b=fc2_b,
                num_heads=heads))
        return blks

    pos = jnp.asarray(get_2d_sincos_pos_embed(embed_dim, grid_size, cls_token=True),
                      jnp.float32)[None]
    pred_pos = jnp.asarray(get_2d_sincos_pos_embed(predictor_embed_dim, grid_size,
                                                   cls_token=True), jnp.float32)[None]

    tpe_w, tpe_b = lin(in_chans * patch_size * patch_size, embed_dim)
    cpe_w, cpe_b = lin(in_chans * patch_size * patch_size, embed_dim)
    pe_w, pe_b = lin(embed_dim, predictor_embed_dim)
    pp_w, pp_b = lin(predictor_embed_dim, embed_dim)

    return dict(
        patch_size=patch_size,
        target_patch_w=tpe_w, target_patch_b=tpe_b,
        context_patch_w=cpe_w, context_patch_b=cpe_b,
        target_cls=0.02 * jax.random.normal(next(keys), (1, 1, embed_dim), jnp.float32),
        context_cls=0.02 * jax.random.normal(next(keys), (1, 1, embed_dim), jnp.float32),
        target_pos=pos, context_pos=pos, predictor_pos=pred_pos,
        target_blocks=make_blocks(depth, embed_dim, num_heads),
        context_blocks=make_blocks(depth, embed_dim, num_heads),
        target_norm_g=jnp.ones((embed_dim,), jnp.float32),
        target_norm_b=jnp.zeros((embed_dim,), jnp.float32),
        context_norm_g=jnp.ones((embed_dim,), jnp.float32),
        context_norm_b=jnp.zeros((embed_dim,), jnp.float32),
        predictor_embed_w=pe_w, predictor_embed_b=pe_b,
        predictor_blocks=make_blocks(predictor_depth, predictor_embed_dim,
                                     predictor_num_heads),
        predictor_norm_g=jnp.ones((predictor_embed_dim,), jnp.float32),
        predictor_norm_b=jnp.zeros((predictor_embed_dim,), jnp.float32),
        predictor_pred_w=pp_w, predictor_pred_b=pp_b,
    )


# ----------------------------------------------------------------------------
# Forward pass (glue in plain JAX, heavy compute in fused Pallas kernels)
# ----------------------------------------------------------------------------

def patchify(imgs, p):
    # NCHW conv with kernel=stride=p  ==  patchify + matmul (row-major patches)
    B, C, H, W = imgs.shape
    hp, wp = H // p, W // p
    x = imgs.reshape(B, C, hp, p, wp, p)
    x = x.transpose(0, 2, 4, 1, 3, 5)          # (B, hp, wp, C, p, p)
    return x.reshape(B, hp * wp, C * p * p)


def block_forward(x, bp):
    # Pre-norm ViT block; LN1 fused into QKV matmul, LN2+GELU fused into fc1,
    # residual adds fused into proj/fc2 epilogues, QKV head-split done inside
    # the attention kernel.  Inter-kernel activations are bf16.
    B, T, D = x.shape
    nh = bp["num_heads"]
    hd = D // nh
    qkv = fused_linear(x, bp["qkv_w"], bp["qkv_b"],
                       ln_g=bp["ln1_g"], ln_b=bp["ln1_b"])          # (B,T,3D) bf16
    o = attention(qkv, nh, hd)                                       # (B,T,D) bf16
    x = fused_linear(o, bp["proj_w"], bp["proj_b"], residual=x)      # +residual
    h = fused_linear(x, bp["fc1_w"], bp["fc1_b"],
                     ln_g=bp["ln2_g"], ln_b=bp["ln2_b"], act="gelu")
    x = fused_linear(h, bp["fc2_w"], bp["fc2_b"], residual=x)        # +residual
    return x


def forward_encoder(imgs, masks, params, prefix, apply_norm=True):
    b, l, h, w = masks.shape
    masks_v = masks.reshape(b, h * w, l)                  # torch .view semantics
    patches = patchify(imgs, params["patch_size"]).astype(jnp.bfloat16)
    x = fused_linear(patches, params[prefix + "_patch_w"], params[prefix + "_patch_b"])
    x = x + params[prefix + "_pos"][:, 1:, :]
    x = x * masks_v
    cls = params[prefix + "_cls"] + params[prefix + "_pos"][:, :1, :]
    cls = jnp.broadcast_to(cls, (x.shape[0], 1, cls.shape[-1]))
    # TODO(synk): T = num_patches+1 is not sublane-aligned; padding the token
    # axis would need explicit attention-key masking to keep exact parity, so
    # only the flattened row axis of each matmul is padded instead.
    x = jnp.concatenate([cls, x], axis=1)
    for bp in params[prefix + "_blocks"]:
        x = block_forward(x, bp)
    if apply_norm:
        x = layernorm(x, params[prefix + "_norm_g"], params[prefix + "_norm_b"])
    return x


def forward_predictor(x, params, in_ln_g=None, in_ln_b=None):
    # The context-encoder output LayerNorm is fused into this first matmul
    # (saves one full (B,T,D) HBM round trip + kernel launch).
    x = fused_linear(x, params["predictor_embed_w"], params["predictor_embed_b"],
                     ln_g=in_ln_g, ln_b=in_ln_b)
    x = x + params["predictor_pos"]
    for bp in params["predictor_blocks"]:
        x = block_forward(x, bp)
    # predictor_norm fused into the predictor_pred matmul; f32 out for the loss
    x = fused_linear(x, params["predictor_pred_w"], params["predictor_pred_b"],
                     ln_g=params["predictor_norm_g"], ln_b=params["predictor_norm_b"],
                     out_dtype=jnp.float32)
    return x[:, 1:, :]


def ijepa_forward(params, imgs, target_masks, context_masks):
    target_emb = forward_encoder(imgs, target_masks, params, "target",
                                 apply_norm=True)                     # f32 (loss input)
    context_emb = forward_encoder(imgs, context_masks, params, "context",
                                  apply_norm=False)                   # bf16, norm fused below
    pred_emb = forward_predictor(context_emb, params,
                                 in_ln_g=params["context_norm_g"],
                                 in_ln_b=params["context_norm_b"])
    B = imgs.shape[0]
    masks2d = target_masks.reshape(B, -1).astype(jnp.float32)         # (B,1,1,P) -> (B,P)
    loss = ijepa_loss(target_emb[:, 1:, :], pred_emb, masks2d)
    return loss, pred_emb, target_masks


# ----------------------------------------------------------------------------
# Demo
# ----------------------------------------------------------------------------

if __name__ == "__main__":
    key = jax.random.PRNGKey(0)
    img_size, patch_size, in_chans = 16, 4, 3
    embed_dim, depth, num_heads = 64, 2, 8
    pred_dim, pred_depth, pred_heads = 32, 1, 4
    B = 2
    num_patches = (img_size // patch_size) ** 2          # 16

    k1, k2, k3, k4 = jax.random.split(key, 4)
    params = init_ijepa_params(k1, img_size, patch_size, in_chans, embed_dim,
                               depth, num_heads, pred_dim, pred_depth,
                               pred_heads, 4.0)

    imgs = jax.random.normal(k2, (B, in_chans, img_size, img_size), jnp.float32)
    # masks shaped (B, 1, 1, num_patches): the only 4-D shape for which the
    # reference module's .view / broadcasting is well-defined.
    target_masks = (jax.random.uniform(k3, (B, 1, 1, num_patches)) > 0.5
                    ).astype(jnp.float32)
    context_masks = (jax.random.uniform(k4, (B, 1, 1, num_patches)) > 0.5
                     ).astype(jnp.float32)

    loss, pred_emb, tm_out = ijepa_forward(params, imgs, target_masks, context_masks)
    jax.block_until_ready((loss, pred_emb, tm_out))
    print("KERNEL_OK")
</pallas_src>

<mosaic_0001>
module attributes {stable_mosaic.version = 11 : i64} {
  func.func @_fused_linear_kernel(%arg0: i32, %arg1: i32, %arg2: i32, %arg3: memref<32x48xbf16, #tpu.memory_space<vmem>>, %arg4: memref<48x64xbf16, #tpu.memory_space<vmem>>, %arg5: memref<1x64xf32, #tpu.memory_space<vmem>>, %arg6: memref<32x64xbf16, #tpu.memory_space<vmem>>) attributes {dimension_semantics = [#tpu.dimension_semantics<parallel>, #tpu.dimension_semantics<parallel>, #tpu.dimension_semantics<arbitrary>], iteration_bounds = array<i64: 1, 1, 1>, scalar_prefetch = 0 : i64, scratch_operands = 0 : i64, tpu.core_type = #tpu.core_type<tc>, window_params = [{transform_indices = @transform_0, window_bounds = array<i64: 32, 48>}, {transform_indices = @transform_1, window_bounds = array<i64: 48, 64>}, {transform_indices = @transform_2, window_bounds = array<i64: 1, 64>}, {transform_indices = @transform_3, window_bounds = array<i64: 32, 64>}]} {
    %c0 = arith.constant 0 : index
    %c0_0 = arith.constant 0 : index
    %0 = vector.load %arg3[%c0, %c0_0] : memref<32x48xbf16, #tpu.memory_space<vmem>>, vector<32x48xbf16>
    %c0_1 = arith.constant 0 : index
    %c0_2 = arith.constant 0 : index
    %1 = vector.load %arg4[%c0_1, %c0_2] : memref<48x64xbf16, #tpu.memory_space<vmem>>, vector<48x64xbf16>
    %cst = arith.constant dense<0.000000e+00> : vector<32x64xf32>
    %2 = tpu.matmul %0, %1, %cst {dimension_numbers = #tpu.dot_dimension_numbers<[1], [0], [0], [1], [0, 0, 1, 1], [], []>} : vector<32x48xbf16>, vector<48x64xbf16>, vector<32x64xf32> -> vector<32x64xf32>
    %c0_3 = arith.constant 0 : index
    %c0_4 = arith.constant 0 : index
    %3 = vector.load %arg5[%c0_3, %c0_4] : memref<1x64xf32, #tpu.memory_space<vmem>>, vector<1x64xf32>
    %4 = vector.broadcast %3 : vector<1x64xf32> to vector<32x64xf32>
    %5 = arith.addf %2, %4 : vector<32x64xf32>
    %6 = arith.truncf %5 : vector<32x64xf32> to vector<32x64xbf16>
    %c0_5 = arith.constant 0 : index
    %c0_6 = arith.constant 0 : index
    %7 = vector.load %arg6[%c0_5, %c0_6] : memref<32x64xbf16, #tpu.memory_space<vmem>>, vector<32x64xbf16>
    tpu.vector_store %arg6[%c0_5, %c0_6], %6 {strides = array<i32>} : memref<32x64xbf16, #tpu.memory_space<vmem>>, vector<32x64xbf16>,
    return
  }
  func.func @transform_0(%arg0: i32, %arg1: i32, %arg2: i32) -> (i32, i32) {
    %c0_i32 = arith.constant 0 : i32
    return %arg0, %arg2 : i32, i32
  }
  func.func @transform_1(%arg0: i32, %arg1: i32, %arg2: i32) -> (i32, i32) {
    %c0_i32 = arith.constant 0 : i32
    return %arg2, %arg1 : i32, i32
  }
  func.func @transform_2(%arg0: i32, %arg1: i32, %arg2: i32) -> (i32, i32) {
    %c0_i32 = arith.constant 0 : i32
    %c0_i32_0 = arith.constant 0 : i32
    return %c0_i32, %arg1 : i32, i32
  }
  func.func @transform_3(%arg0: i32, %arg1: i32, %arg2: i32) -> (i32, i32) {
    %c0_i32 = arith.constant 0 : i32
    return %arg0, %arg1 : i32, i32
  }
}

</mosaic_0001>

<llo_original>
// kernel: tpu_custom_call.1
$region0: #{tpu_custom_call.1}
  #allocation0 [shape = 'u32[]', space=smem, size = 0x4, offset = 0x4, fixed_abs, tag = 'smem constant byte address 0x4 - core index']
  #allocation1 [shape = 'u32[72,128]{1,0:T(1,128)}', space=vmem, size = 0x9000, scoped, tag = 'internal scratch']
  %s0 = inlined_call_operand.hbm [shape: bf16[32,48], index: 0, kind: input, shape index: {}]
  %s1 = inlined_call_operand.hbm [shape: bf16[48,64], index: 1, kind: input, shape index: {}]
  %s2 = inlined_call_operand.vmem [shape: f32[1,64], index: 2, kind: input, shape index: {}]
  %s3 = inlined_call_operand.hbm [shape: bf16[32,64], index: 3, kind: output, shape index: {}]
  %s4 = sld [smem:[#allocation0]]
  $region30: #{tpu_custom_call.1} parent=0
    _
  %s6 = ssub.s32 1, %s4
  %s7 = scalar_select 0, %s6, %s4
  $region1: #{tpu_custom_call.1} parent=0
    #allocation2 [shape = 'u8[8192]{0}', space=vmem, size = 0x2000, scoped, tag = 'input window, operand 0, single buffered']
    #allocation3 [shape = 's32[1]{0}', space=sflag, size = 0x4, scoped, tag = 'scoped memory for tpu_custom_call.1']
    #allocation4 [shape = 's32[1]{0}', space=sflag, size = 0x4, scoped, tag = 'scoped memory for tpu_custom_call.1']
    #allocation5 [shape = 'u8[12288]{0}', space=vmem, size = 0x3000, scoped, tag = 'input window, operand 1, single buffered']
    #allocation6 [shape = 's32[1]{0}', space=sflag, size = 0x4, scoped, tag = 'scoped memory for tpu_custom_call.1']
    #allocation7 [shape = 'u8[8192]{0}', space=vmem, size = 0x2000, scoped, tag = 'output window, operand 0, single buffered']
    %8 = vsyncpa [#allocation3], 0
    %9 = vsyncpa [#allocation6], 0
    %10 = vsyncpa [#allocation4], 0
    // Predicated region
    $region2: #{tpu_custom_call.1} parent=1 // pred_check
      _
    $region3: #{tpu_custom_call.1} parent=1 // pred_check_branch
      %12 = sbr.rel (0) target = $region5
    $region4: #{tpu_custom_call.1} parent=1 // pred_region
      %14 = vsyncadd [#allocation3], 0
      %s15 = sshll.u32 %s0, 4
      %s16 = int_to_ptr.hbm [resolvable:$true] %s15
      %s17 = sshll.u32 [#allocation2], 4
      %s18 = int_to_ptr.vmem [resolvable:$true] %s17
      %23 = dma.hbm_to_vmem [thread:$0]  %s16, 256, %s18, [#allocation3], 64, 64, 4
    $region5: #{tpu_custom_call.1} parent=1 // pred_fallthru
      _
    // Predicated region
    $region6: #{tpu_custom_call.1} parent=1 // pred_check
      _
    $region7: #{tpu_custom_call.1} parent=1 // pred_check_branch
      %25 = sbr.rel (0) target = $region9
    $region8: #{tpu_custom_call.1} parent=1 // pred_region
      %27 = vsyncadd [#allocation6], 0
      %s28 = sshll.u32 %s1, 4
      %s29 = int_to_ptr.hbm [resolvable:$true] %s28
      %s30 = sshll.u32 [#allocation5], 4
      %s31 = int_to_ptr.vmem [resolvable:$true] %s30
      %36 = dma.hbm_to_vmem [thread:$0]  %s29, 384, %s31, [#allocation6], 64, 64, 4
    $region9: #{tpu_custom_call.1} parent=1 // pred_fallthru
      _
    // Predicated region
    $region10: #{tpu_custom_call.1} parent=1 // pred_check
      _
    $region11: #{tpu_custom_call.1} parent=1 // pred_check_branch
      %38 = sbr.rel (0) target = $region13
    $region12: #{tpu_custom_call.1} parent=1 // pred_region
      _
    $region13: #{tpu_custom_call.1} parent=1 // pred_fallthru
      _
    // Predicated region
    $region14: #{tpu_custom_call.1} parent=1 // pred_check
      _
    $region15: #{tpu_custom_call.1} parent=1 // pred_check_branch
      %40 = sbr.rel (0) target = $region17
    $region16: #{tpu_custom_call.1} parent=1 // pred_region
      %42 = dma.done [#allocation3], 256
    $region17: #{tpu_custom_call.1} parent=1 // pred_fallthru
      _
    // Predicated region
    $region18: #{tpu_custom_call.1} parent=1 // pred_check
      _
    $region19: #{tpu_custom_call.1} parent=1 // pred_check_branch
      %44 = sbr.rel (0) target = $region21
    $region20: #{tpu_custom_call.1} parent=1 // pred_region
      %46 = dma.done [#allocation6], 384
    $region21: #{tpu_custom_call.1} parent=1 // pred_fallthru
      _
    %v48 = vld [vmem:[#allocation2] sm:$0xf]
    %v49 = vld [vmem:[#allocation2 + $0x4] sm:$0xf]
    %v50 = vld [vmem:[#allocation2 + $0x8] sm:$0xf]
    %v51 = vld [vmem:[#allocation2 + $0xc] sm:$0xf]
    %v52 = vld [vmem:[#allocation5] sm:$0xf]
    %v53 = vld [vmem:[#allocation5 + $0x4] sm:$0xf]
    %v54 = vld [vmem:[#allocation5 + $0x8] sm:$0xf]
    %v55 = vld [vmem:[#allocation5 + $0xc] sm:$0xf]
    %v56 = vld [vmem:[#allocation5 + $0x10] sm:$0xf]
    %v57 = vld [vmem:[#allocation5 + $0x14] sm:$0xf]
    %v58 = vld [vmem:[%s2] sm:$0x1]
    %v60 = vperm.slane %v58, 0
    %v66 = vunpack.c.l.b16 %v48
    %v67 = vunpack.c.l.b16 %v49
    %v68 = vunpack.c.l.b16 %v50
    %v69 = vunpack.c.l.b16 %v51
    %v70 = vpack.c.b16 %v67, %v66
    %v71 = vpack.c.b16 %v69, %v68
    %v78 = vunpack.c.l.b16 %v52
    %v79 = vunpack.c.l.b16 %v53
    %v80 = vunpack.c.l.b16 %v54
    %v81 = vunpack.c.l.b16 %v55
    %v82 = vunpack.c.l.b16 %v56
    %v83 = vunpack.c.l.b16 %v57
    %v84 = vpack.c.b16 %v79, %v78
    %v85 = vpack.c.b16 %v81, %v80
    %v86 = vpack.c.b16 %v83, %v82
    %vm90 = vcmask 392192
    %v92 = vsel %vm90, %v70, 0
    %v95 = vsel %vm90, %v71, 0
    %97 = vmatpush.bf16.msra.mxu0 0
    %98 = vmatpush.bf16.msra.mxu0 0
    %99 = vmatpush.bf16.msra.mxu0 0
    %100 = vmatpush.bf16.msra.mxu0 0
    %101 = vmatpush.bf16.msra.mxu0 0
    %102 = vmatpush.bf16.msra.mxu0 %v86
    %103 = vmatpush.bf16.msra.mxu0 %v85
    %104 = vmatpush.bf16.msra.mxu0 %v84
    %105 = vmatmul.bf16.gmra.mxu0 %v92
    %v106 = vpop.f32.mrf.mxu0
    %v107 = vadd.f32 %v60, %v106
    %v108 = vpop.f32.mrf.mxu0
    %v109 = vadd.f32 %v60, %v108
    %110 = vmatmul.bf16.gmra.mxu0 %v95
    %v111 = vpop.f32.mrf.mxu0
    %v112 = vadd.f32 %v60, %v111
    %v113 = vpop.f32.mrf.mxu0
    %v114 = vadd.f32 %v60, %v113
    %115 = vdwg.mxu0
    %v116 = vpack.c.bf16 %v107, %v107
    %v117 = vpack.c.bf16 %v109, %v109
    %v118 = vpack.c.bf16 %v112, %v112
    %v119 = vpack.c.bf16 %v114, %v114
    %vm120 = vcmask 519168
    %121 = vst.msk [vmem:[#allocation7] sm:$0xf] %vm120, %v116
    %122 = vst.msk [vmem:[#allocation7 + $0x4] sm:$0xf] %vm120, %v117
    %123 = vst.msk [vmem:[#allocation7 + $0x8] sm:$0xf] %vm120, %v118
    %124 = vst.msk [vmem:[#allocation7 + $0xc] sm:$0xf] %vm120, %v119
    // Predicated region
    $region22: #{tpu_custom_call.1} parent=1 // pred_check
      _
    $region23: #{tpu_custom_call.1} parent=1 // pred_check_branch
      %126 = sbr.rel (0) target = $region25
    $region24: #{tpu_custom_call.1} parent=1 // pred_region
      %128 = vsyncadd [#allocation4], 0
      %s129 = sshll.u32 [#allocation7], 4
      %s130 = int_to_ptr.vmem [resolvable:$true] %s129
      %s131 = sshll.u32 %s3, 4
      %s132 = int_to_ptr.hbm [resolvable:$true] %s131
      %137 = dma.vmem_to_hbm [thread:$0]  %s130, 256, %s132, [#allocation4], 64, 64, 4
    $region25: #{tpu_custom_call.1} parent=1 // pred_fallthru
      _
    // Predicated region
    $region26: #{tpu_custom_call.1} parent=1 // pred_check
      _
    $region27: #{tpu_custom_call.1} parent=1 // pred_check_branch
      %139 = sbr.rel (0) target = $region29
    $region28: #{tpu_custom_call.1} parent=1 // pred_region
      %141 = dma.done [#allocation4], 256
    $region29: #{tpu_custom_call.1} parent=1 // pred_fallthru
      _
    %142 = vsyncpa [#allocation3], 1
    %143 = vsyncpa [#allocation6], 1
    %144 = vsyncpa [#allocation4], 1

</llo_original>
